<compile_context>
chip_gen: v5e
topology: v5e:2x2
jax: 0.10.0
libtpu: 0.0.40
codegen_flags: <defaults>
</compile_context>

<pallas_src>
import math

import jax
import jax.numpy as jnp
from jax import lax
from jax.experimental import pallas as pl
from jax.experimental.pallas import tpu as pltpu

IN_DIM = 20                 # per-modality input width
HID = 32                    # GMU hidden width
K_IN = 2 * IN_DIM           # total feature width (x1 | x2) = 40
N_UNITS = 3 * HID           # stacked output units: [fc1 | fc2 | gate] = 96
P_LANES = 128               # packed parameter buffer lane width
BIAS_LANE = K_IN            # lane 40: hidden bias column [b1 | b2 | bg]
HEAD_W_LANE = 64            # lanes 64..95: head weight row (row 0)
HEAD_B_LANE = HEAD_W_LANE + HID  # lane 96: head bias (row 0)

LANE = 128                  # output / batch lane quantum
TB_MAX = 4096               # (tb,20) f32 block lane-pads 20->128 => 2 MiB/buffer at 4096;
                            # 2 inputs x 2 buffers = 8 MiB  (fits v5e's 16 MiB default)


def _classifier_kernel(p_ref, x1_ref, x2_ref, out_ref):
    """Fused GMU + head.

    p_ref  : (96, 128) packed params (VMEM-resident across grid steps)
               [:, 0:20]   -> weights applied to x1   (rows: fc1 | 0 | gate[:20].T)
               [:, 20:40]  -> weights applied to x2   (rows: 0 | fc2 | gate[20:].T)
               [:, 40]     -> hidden bias column [b1 | b2 | bg]
               [0, 64:96]  -> head weight row wo ;  [0, 96] -> head bias bo
    x1_ref : (tb, 20) modality-1 activations (batch on sublanes)
    x2_ref : (tb, 20) modality-2 activations
    out_ref: (1, tb) sigmoid probabilities (batch on lanes -> lane-dense store)
    """
    w_a = p_ref[:, 0:IN_DIM]                       # (96, 20)
    w_b = p_ref[:, IN_DIM:K_IN]                    # (96, 20)
    b_col = p_ref[:, BIAS_LANE:BIAS_LANE + 1]      # (96, 1)

    # Two MXU passes contracting the 20-wide feature dim of each modality produce
    # the (96, tb) slab directly in (features, batch) layout — no in-kernel
    # transpose, no host-side concat.  Rows 0:32 = fc1(x1), 32:64 = fc2(x2),
    # 64:96 = gate(cat(x1, x2)).
    dn = (((1,), (1,)), ((), ()))                  # A @ B^T
    z = (lax.dot_general(w_a, x1_ref[...], dn,
                         precision=lax.Precision.DEFAULT,
                         preferred_element_type=jnp.float32)
         + lax.dot_general(w_b, x2_ref[...], dn,
                           precision=lax.Precision.DEFAULT,
                           preferred_element_type=jnp.float32)
         + b_col)                                  # (96, tb)

    h1 = jnp.tanh(z[0:HID, :])
    h2 = jnp.tanh(z[HID:2 * HID, :])
    g = jax.nn.sigmoid(z[2 * HID:3 * HID, :])
    fused = h2 + g * (h1 - h2)                     # == g*h1 + (1-g)*h2, one less VALU op

    # 32 -> 1 head on the (idle) MXU: (1, 32) x (32, tb) keeps VPU/XLU slots free.
    wo_row = p_ref[0:1, HEAD_W_LANE:HEAD_W_LANE + HID]   # (1, 32)
    bo = p_ref[0:1, HEAD_B_LANE:HEAD_B_LANE + 1]         # (1, 1)
    logits = jnp.dot(wo_row, fused,
                     precision=lax.Precision.DEFAULT,
                     preferred_element_type=jnp.float32) + bo   # (1, tb)

    out_ref[...] = jax.nn.sigmoid(logits)


def pack_params(w1, b1, w2, b2, wg, bg, wo, bo):
    """Pack every Classifier parameter into one lane-aligned (96, 128) f32 buffer.

    Weights use the (in_features, out_features) convention (i.e. PyTorch weight.T),
    biases are (1, out_features); wo is (HID, 1), bo is (1, 1).
    """
    assert w1.shape == (IN_DIM, HID), w1.shape
    assert w2.shape == (IN_DIM, HID), w2.shape
    assert wg.shape == (K_IN, HID), wg.shape
    assert b1.shape == (1, HID) and b2.shape == (1, HID) and bg.shape == (1, HID)
    assert wo.shape == (HID, 1) and bo.shape == (1, 1)

    z = jnp.zeros((IN_DIM, HID), jnp.float32)
    w_cat = jnp.concatenate(
        [jnp.concatenate([w1, z, wg[:IN_DIM]], axis=1),      # columns fed by x1
         jnp.concatenate([z, w2, wg[IN_DIM:]], axis=1)],     # columns fed by x2
        axis=0)                                              # (40, 96)
    b_cat = jnp.concatenate([b1, b2, bg], axis=1)            # (1, 96)

    packed = jnp.zeros((N_UNITS, P_LANES), jnp.float32)
    packed = packed.at[:, :K_IN].set(w_cat.T)                # (96, 40) block weight
    packed = packed.at[:, BIAS_LANE].set(b_cat[0])           # hidden bias column
    packed = packed.at[0, HEAD_W_LANE:HEAD_W_LANE + HID].set(wo[:, 0])  # head weight row
    packed = packed.at[0, HEAD_B_LANE].set(bo[0, 0])         # head bias
    return packed


def _round_up(x, m):
    return ((x + m - 1) // m) * m


def _choose_tile(B):
    """Pick a lane-aligned, balanced batch tile; >= 2 (even) grid steps when B allows."""
    tb = min(TB_MAX, _round_up(-(-B // 2), LANE))    # aim for >= 2 steps (v7x dual-TC)
    n = -(-B // tb)
    if n > 1 and n % 2:
        n += 1                                        # even step count for megacore split
    tb = min(TB_MAX, _round_up(-(-B // n), LANE))     # balance tiles, keep 128-lane multiple
    return tb, n * tb


@jax.jit
def classifier_forward(x1, x2, packed):
    """x1, x2: (B, IN_DIM) f32. Returns (B,) f32 (matches .squeeze(-1))."""
    B = x1.shape[0]
    tb, bp = _choose_tile(B)
    if bp != B:                                       # zero-pad: padded rows produce
        pad = bp - B                                  # sigmoid(bias)-only values, sliced off
        x1 = jnp.pad(x1, ((0, pad), (0, 0)))
        x2 = jnp.pad(x2, ((0, pad), (0, 0)))

    out = pl.pallas_call(
        _classifier_kernel,
        out_shape=jax.ShapeDtypeStruct((1, bp), jnp.float32),
        grid=(bp // tb,),
        in_specs=[
            pl.BlockSpec((N_UNITS, P_LANES), lambda i: (0, 0)),  # params: one DMA, VMEM-resident
            pl.BlockSpec((tb, IN_DIM), lambda i: (i, 0)),        # x1: pipelined over batch
            pl.BlockSpec((tb, IN_DIM), lambda i: (i, 0)),        # x2: pipelined over batch
        ],
        out_specs=pl.BlockSpec((1, tb), lambda i: (0, i)),       # lane-dense output
        compiler_params=pltpu.CompilerParams(
            dimension_semantics=("parallel",)),                  # v7x: shard batch over both TCs
    )(packed, x1, x2)
    return out[0, :B]


def init_params(key, in_dim=IN_DIM, hidden_dim=HID):
    """Deterministic synthetic init (PyTorch-style uniform(-1/sqrt(fan_in), ...))."""
    ks = jax.random.split(key, 8)

    def lin(kw, kb, fan_in, fan_out):
        bound = 1.0 / math.sqrt(fan_in)
        w = jax.random.uniform(kw, (fan_in, fan_out), jnp.float32, -bound, bound)
        b = jax.random.uniform(kb, (1, fan_out), jnp.float32, -bound, bound)
        return w, b

    w1, b1 = lin(ks[0], ks[1], in_dim, hidden_dim)           # fc1
    w2, b2 = lin(ks[2], ks[3], in_dim, hidden_dim)           # fc2
    wg, bg = lin(ks[4], ks[5], 2 * in_dim, hidden_dim)       # gate
    wo, bo = lin(ks[6], ks[7], hidden_dim, 1)                # out head
    return (w1, b1, w2, b2, wg, bg, wo, bo)


def _reference(x1, x2, raw):
    (w1, b1, w2, b2, wg, bg, wo, bo) = raw
    h1 = jnp.tanh(x1 @ w1 + b1)
    h2 = jnp.tanh(x2 @ w2 + b2)
    g = jax.nn.sigmoid(jnp.concatenate([x1, x2], axis=-1) @ wg + bg)
    fused = g * h1 + (1.0 - g) * h2
    return jax.nn.sigmoid(fused @ wo + bo)[:, 0]


if __name__ == "__main__":
    key = jax.random.PRNGKey(0)
    k_params, k_x1, k_x2, k_y1, k_y2 = jax.random.split(key, 5)

    raw = init_params(k_params)
    packed = pack_params(*raw)

    # Small demo shape (single grid step, lane-padded to 128).
    B = 8
    x1 = jax.random.normal(k_x1, (B, IN_DIM), jnp.float32)
    x2 = jax.random.normal(k_x2, (B, IN_DIM), jnp.float32)
    y = classifier_forward(x1, x2, packed)
    jax.block_until_ready(y)
    y_ref = _reference(x1, x2, raw)
    assert y.shape == (B,)
    err = float(jnp.max(jnp.abs(y - y_ref)))
    # Tolerance covers TPU default-precision f32 matmul / accumulation-order deltas.
    assert jnp.allclose(y, y_ref, atol=2e-3, rtol=2e-3), err

    # Multi-tile / padded-batch path (exercises grid > 1 and batch padding).
    B2 = 300
    z1 = jax.random.normal(k_y1, (B2, IN_DIM), jnp.float32)
    z2 = jax.random.normal(k_y2, (B2, IN_DIM), jnp.float32)
    y2 = classifier_forward(z1, z2, packed)
    jax.block_until_ready(y2)
    y2_ref = _reference(z1, z2, raw)
    assert y2.shape == (B2,)
    err2 = float(jnp.max(jnp.abs(y2 - y2_ref)))
    assert jnp.allclose(y2, y2_ref, atol=2e-3, rtol=2e-3), err2

    print("KERNEL_OK")
</pallas_src>

<mosaic_0001>
module attributes {stable_mosaic.version = 11 : i64} {
  func.func @_classifier_kernel(%arg0: i32, %arg1: memref<96x128xf32, #tpu.memory_space<vmem>>, %arg2: memref<128x20xf32, #tpu.memory_space<vmem>>, %arg3: memref<128x20xf32, #tpu.memory_space<vmem>>, %arg4: memref<1x128xf32, #tpu.memory_space<vmem>>) attributes {dimension_semantics = [#tpu.dimension_semantics<parallel>], iteration_bounds = array<i64: 1>, scalar_prefetch = 0 : i64, scratch_operands = 0 : i64, tpu.core_type = #tpu.core_type<tc>, window_params = [{pipeline_mode = #tpu.pipeline_mode<synchronous>, transform_indices = @transform_0, window_bounds = array<i64: 96, 128>}, {transform_indices = @transform_1, window_bounds = array<i64: 128, 20>}, {transform_indices = @transform_2, window_bounds = array<i64: 128, 20>}, {transform_indices = @transform_3, window_bounds = array<i64: 1, 128>}]} {
    %c0 = arith.constant 0 : index
    %c0_0 = arith.constant 0 : index
    %0 = vector.load %arg1[%c0, %c0_0] : memref<96x128xf32, #tpu.memory_space<vmem>>, vector<96x20xf32>
    %c0_1 = arith.constant 0 : index
    %c20 = arith.constant 20 : index
    %1 = vector.load %arg1[%c0_1, %c20] : memref<96x128xf32, #tpu.memory_space<vmem>>, vector<96x20xf32>
    %c0_2 = arith.constant 0 : index
    %c40 = arith.constant 40 : index
    %2 = vector.load %arg1[%c0_2, %c40] : memref<96x128xf32, #tpu.memory_space<vmem>>, vector<96x1xf32>
    %c0_3 = arith.constant 0 : index
    %c0_4 = arith.constant 0 : index
    %3 = vector.load %arg2[%c0_3, %c0_4] : memref<128x20xf32, #tpu.memory_space<vmem>>, vector<128x20xf32>
    %cst = arith.constant dense<0.000000e+00> : vector<96x128xf32>
    %4 = tpu.matmul %0, %3, %cst {dimension_numbers = #tpu.dot_dimension_numbers<[1], [1], [0], [0], [0, 0, 1, 0], [], []>} : vector<96x20xf32>, vector<128x20xf32>, vector<96x128xf32> -> vector<96x128xf32>
    %c0_5 = arith.constant 0 : index
    %c0_6 = arith.constant 0 : index
    %5 = vector.load %arg3[%c0_5, %c0_6] : memref<128x20xf32, #tpu.memory_space<vmem>>, vector<128x20xf32>
    %cst_7 = arith.constant dense<0.000000e+00> : vector<96x128xf32>
    %6 = tpu.matmul %1, %5, %cst_7 {dimension_numbers = #tpu.dot_dimension_numbers<[1], [1], [0], [0], [0, 0, 1, 0], [], []>} : vector<96x20xf32>, vector<128x20xf32>, vector<96x128xf32> -> vector<96x128xf32>
    %7 = arith.addf %4, %6 : vector<96x128xf32>
    %8 = vector.broadcast %2 : vector<96x1xf32> to vector<96x128xf32>
    %9 = arith.addf %7, %8 : vector<96x128xf32>
    %10 = vector.extract_strided_slice %9 {offsets = [0, 0], sizes = [32, 128], strides = [1, 1]} : vector<96x128xf32> to vector<32x128xf32>
    %11 = math.tanh %10 : vector<32x128xf32>
    %12 = vector.extract_strided_slice %9 {offsets = [32, 0], sizes = [32, 128], strides = [1, 1]} : vector<96x128xf32> to vector<32x128xf32>
    %13 = math.tanh %12 : vector<32x128xf32>
    %14 = vector.extract_strided_slice %9 {offsets = [64, 0], sizes = [32, 128], strides = [1, 1]} : vector<96x128xf32> to vector<32x128xf32>
    %15 = arith.negf %14 : vector<32x128xf32>
    %16 = math.exp %15 : vector<32x128xf32>
    %cst_8 = arith.constant 1.000000e+00 : f32
    %17 = vector.broadcast %cst_8 : f32 to vector<32x128xf32>
    %18 = arith.addf %17, %16 : vector<32x128xf32>
    %19 = arith.divf %17, %18 : vector<32x128xf32>
    %20 = arith.subf %11, %13 : vector<32x128xf32>
    %21 = arith.mulf %19, %20 : vector<32x128xf32>
    %22 = arith.addf %13, %21 : vector<32x128xf32>
    %c0_9 = arith.constant 0 : index
    %c64 = arith.constant 64 : index
    %23 = vector.load %arg1[%c0_9, %c64] : memref<96x128xf32, #tpu.memory_space<vmem>>, vector<1x32xf32>
    %c0_10 = arith.constant 0 : index
    %c96 = arith.constant 96 : index
    %24 = vector.load %arg1[%c0_10, %c96] : memref<96x128xf32, #tpu.memory_space<vmem>>, vector<1x1xf32>
    %cst_11 = arith.constant dense<0.000000e+00> : vector<1x128xf32>
    %25 = tpu.matmul %23, %22, %cst_11 {dimension_numbers = #tpu.dot_dimension_numbers<[1], [0], [0], [1], [0, 0, 1, 1], [], []>} : vector<1x32xf32>, vector<32x128xf32>, vector<1x128xf32> -> vector<1x128xf32>
    %26 = vector.broadcast %24 : vector<1x1xf32> to vector<1x128xf32>
    %27 = arith.addf %25, %26 : vector<1x128xf32>
    %28 = arith.negf %27 : vector<1x128xf32>
    %29 = math.exp %28 : vector<1x128xf32>
    %cst_12 = arith.constant 1.000000e+00 : f32
    %30 = vector.broadcast %cst_12 : f32 to vector<1x128xf32>
    %31 = arith.addf %30, %29 : vector<1x128xf32>
    %32 = arith.divf %30, %31 : vector<1x128xf32>
    %c0_13 = arith.constant 0 : index
    %c0_14 = arith.constant 0 : index
    %33 = vector.load %arg4[%c0_13, %c0_14] : memref<1x128xf32, #tpu.memory_space<vmem>>, vector<1x128xf32>
    tpu.vector_store %arg4[%c0_13, %c0_14], %32 {strides = array<i32>} : memref<1x128xf32, #tpu.memory_space<vmem>>, vector<1x128xf32>,
    return
  }
  func.func @transform_0(%arg0: i32) -> (i32, i32) {
    %c0_i32 = arith.constant 0 : i32
    %c0_i32_0 = arith.constant 0 : i32
    %c0_i32_1 = arith.constant 0 : i32
    return %c0_i32, %c0_i32_0 : i32, i32
  }
  func.func @transform_1(%arg0: i32) -> (i32, i32) {
    %c0_i32 = arith.constant 0 : i32
    %c0_i32_0 = arith.constant 0 : i32
    return %arg0, %c0_i32 : i32, i32
  }
  func.func @transform_2(%arg0: i32) -> (i32, i32) {
    %c0_i32 = arith.constant 0 : i32
    %c0_i32_0 = arith.constant 0 : i32
    return %arg0, %c0_i32 : i32, i32
  }
  func.func @transform_3(%arg0: i32) -> (i32, i32) {
    %c0_i32 = arith.constant 0 : i32
    %c0_i32_0 = arith.constant 0 : i32
    return %c0_i32, %arg0 : i32, i32
  }
}

</mosaic_0001>

<llo_original>
// kernel: classifier_forward.1
$region0: #{classifier_forward.1}
  #allocation0 [shape = 'u32[]', space=smem, size = 0x4, offset = 0x4, fixed_abs, tag = 'smem constant byte address 0x4 - core index']
  #allocation1 [shape = 'u32[72,128]{1,0:T(1,128)}', space=vmem, size = 0x9000, scoped, tag = 'internal scratch']
  %s0 = inlined_call_operand.vmem [shape: f32[96,128], index: 0, kind: input, shape index: {}]
  %s1 = inlined_call_operand.vmem [shape: f32[128,20], index: 1, kind: input, shape index: {}]
  %s2 = inlined_call_operand.vmem [shape: f32[128,20], index: 2, kind: input, shape index: {}]
  %s3 = inlined_call_operand.vmem [shape: f32[1,128], index: 3, kind: output, shape index: {}]
  %s4 = sld [smem:[#allocation0]]
  $region22: #{classifier_forward.1} parent=0
    _
  %s6 = ssub.s32 1, %s4
  %s7 = scalar_select 0, %s6, %s4
  // Predicated region
  $region2: #{classifier_forward.1} parent=0 // pred_check
    _
  $region3: #{classifier_forward.1} parent=0 // pred_check_branch
    %9 = sbr.rel (0) target = $region5
  $region4: #{classifier_forward.1} parent=0 // pred_region
    _
  $region5: #{classifier_forward.1} parent=0 // pred_fallthru
    _
  // Predicated region
  $region6: #{classifier_forward.1} parent=0 // pred_check
    _
  $region7: #{classifier_forward.1} parent=0 // pred_check_branch
    %11 = sbr.rel (0) target = $region9
  $region8: #{classifier_forward.1} parent=0 // pred_region
    _
  $region9: #{classifier_forward.1} parent=0 // pred_fallthru
    _
  // Predicated region
  $region10: #{classifier_forward.1} parent=0 // pred_check
    _
  $region11: #{classifier_forward.1} parent=0 // pred_check_branch
    %13 = sbr.rel (0) target = $region13
  $region12: #{classifier_forward.1} parent=0 // pred_region
    _
  $region13: #{classifier_forward.1} parent=0 // pred_fallthru
    _
  %v14 = vld [vmem:[%s0] sm:$0xff]
  %v15 = vld [vmem:[%s0 + $0x8] sm:$0xff]
  %v16 = vld [vmem:[%s0 + $0x10] sm:$0xff]
  %v17 = vld [vmem:[%s0 + $0x18] sm:$0xff]
  %v18 = vld [vmem:[%s0 + $0x20] sm:$0xff]
  %v19 = vld [vmem:[%s0 + $0x28] sm:$0xff]
  %v20 = vld [vmem:[%s0 + $0x30] sm:$0xff]
  %v21 = vld [vmem:[%s0 + $0x38] sm:$0xff]
  %v22 = vld [vmem:[%s0 + $0x40] sm:$0xff]
  %v23 = vld [vmem:[%s0 + $0x48] sm:$0xff]
  %v24 = vld [vmem:[%s0 + $0x50] sm:$0xff]
  %v25 = vld [vmem:[%s0 + $0x58] sm:$0xff]
  %v26 = vld [vmem:[%s1] sm:$0xff]
  %v27 = vld [vmem:[%s1 + $0x8] sm:$0xff]
  %v28 = vld [vmem:[%s1 + $0x10] sm:$0xff]
  %v29 = vld [vmem:[%s1 + $0x18] sm:$0xff]
  %v30 = vld [vmem:[%s1 + $0x20] sm:$0xff]
  %v31 = vld [vmem:[%s1 + $0x28] sm:$0xff]
  %v32 = vld [vmem:[%s1 + $0x30] sm:$0xff]
  %v33 = vld [vmem:[%s1 + $0x38] sm:$0xff]
  %v34 = vld [vmem:[%s1 + $0x40] sm:$0xff]
  %v35 = vld [vmem:[%s1 + $0x48] sm:$0xff]
  %v36 = vld [vmem:[%s1 + $0x50] sm:$0xff]
  %v37 = vld [vmem:[%s1 + $0x58] sm:$0xff]
  %v38 = vld [vmem:[%s1 + $0x60] sm:$0xff]
  %v39 = vld [vmem:[%s1 + $0x68] sm:$0xff]
  %v40 = vld [vmem:[%s1 + $0x70] sm:$0xff]
  %v41 = vld [vmem:[%s1 + $0x78] sm:$0xff]
  %v42 = vld [vmem:[%s2] sm:$0xff]
  %v43 = vld [vmem:[%s2 + $0x8] sm:$0xff]
  %v44 = vld [vmem:[%s2 + $0x10] sm:$0xff]
  %v45 = vld [vmem:[%s2 + $0x18] sm:$0xff]
  %v46 = vld [vmem:[%s2 + $0x20] sm:$0xff]
  %v47 = vld [vmem:[%s2 + $0x28] sm:$0xff]
  %v48 = vld [vmem:[%s2 + $0x30] sm:$0xff]
  %v49 = vld [vmem:[%s2 + $0x38] sm:$0xff]
  %v50 = vld [vmem:[%s2 + $0x40] sm:$0xff]
  %v51 = vld [vmem:[%s2 + $0x48] sm:$0xff]
  %v52 = vld [vmem:[%s2 + $0x50] sm:$0xff]
  %v53 = vld [vmem:[%s2 + $0x58] sm:$0xff]
  %v54 = vld [vmem:[%s2 + $0x60] sm:$0xff]
  %v55 = vld [vmem:[%s2 + $0x68] sm:$0xff]
  %v56 = vld [vmem:[%s2 + $0x70] sm:$0xff]
  %v57 = vld [vmem:[%s2 + $0x78] sm:$0xff]
  %70 = vrot.lane.b32.xlu0 %v14, 108
  %v71 = vpop.permute.xlu0 %70
  %72 = vrot.lane.b32.xlu0 %v15, 108
  %v73 = vpop.permute.xlu0 %72
  %74 = vrot.lane.b32.xlu0 %v16, 108
  %v75 = vpop.permute.xlu0 %74
  %76 = vrot.lane.b32.xlu0 %v17, 108
  %v77 = vpop.permute.xlu0 %76
  %78 = vrot.lane.b32.xlu0 %v18, 108
  %v79 = vpop.permute.xlu0 %78
  %80 = vrot.lane.b32.xlu0 %v19, 108
  %v81 = vpop.permute.xlu0 %80
  %82 = vrot.lane.b32.xlu0 %v20, 108
  %v83 = vpop.permute.xlu0 %82
  %84 = vrot.lane.b32.xlu0 %v21, 108
  %v85 = vpop.permute.xlu0 %84
  %86 = vrot.lane.b32.xlu0 %v22, 108
  %v87 = vpop.permute.xlu0 %86
  %88 = vrot.lane.b32.xlu0 %v23, 108
  %v89 = vpop.permute.xlu0 %88
  %90 = vrot.lane.b32.xlu0 %v24, 108
  %v91 = vpop.permute.xlu0 %90
  %92 = vrot.lane.b32.xlu0 %v25, 108
  %v93 = vpop.permute.xlu0 %92
  %vm94 = vcmask 162816
  %v95 = vsel %vm94, %v71, 0
  %v97 = vsel %vm94, %v73, 0
  %v99 = vsel %vm94, %v75, 0
  %v101 = vsel %vm94, %v77, 0
  %v103 = vsel %vm94, %v79, 0
  %v105 = vsel %vm94, %v81, 0
  %v107 = vsel %vm94, %v83, 0
  %v109 = vsel %vm94, %v85, 0
  %v111 = vsel %vm94, %v87, 0
  %v113 = vsel %vm94, %v89, 0
  %v115 = vsel %vm94, %v91, 0
  %v117 = vsel %vm94, %v93, 0
  %v120 = vsel %vm94, %v42, 0
  %v123 = vsel %vm94, %v43, 0
  %v126 = vsel %vm94, %v44, 0
  %v129 = vsel %vm94, %v45, 0
  %v132 = vsel %vm94, %v46, 0
  %v135 = vsel %vm94, %v47, 0
  %v138 = vsel %vm94, %v48, 0
  %v141 = vsel %vm94, %v49, 0
  %v144 = vsel %vm94, %v50, 0
  %v147 = vsel %vm94, %v51, 0
  %v150 = vsel %vm94, %v52, 0
  %v153 = vsel %vm94, %v53, 0
  %v156 = vsel %vm94, %v54, 0
  %v159 = vsel %vm94, %v55, 0
  %v162 = vsel %vm94, %v56, 0
  %v165 = vsel %vm94, %v57, 0
  %167 = vmatpush.xpose.msra.mxu0 %v165
  %168 = vmatpush.xpose.msra.mxu0 %v162
  %169 = vmatpush.xpose.msra.mxu0 %v159
  %170 = vmatpush.xpose.msra.mxu0 %v156
  %171 = vmatpush.xpose.msra.mxu0 %v153
  %172 = vmatpush.xpose.msra.mxu0 %v150
  %173 = vmatpush.xpose.msra.mxu0 %v147
  %174 = vmatpush.xpose.msra.mxu0 %v144
  %175 = vmatpush.xpose.msra.mxu0 %v141
  %176 = vmatpush.xpose.msra.mxu0 %v138
  %177 = vmatpush.xpose.msra.mxu0 %v135
  %178 = vmatpush.xpose.msra.mxu0 %v132
  %179 = vmatpush.xpose.msra.mxu0 %v129
  %180 = vmatpush.xpose.msra.mxu0 %v126
  %181 = vmatpush.xpose.msra.mxu0 %v123
  %182 = vmatpush.xpose.msra.mxu0 %v120
  %183 = vmatmul.f32.gmra.mxu0 %v95
  %v184 = vpop.f32.mrf.mxu0
  %v185 = vadd.f32 0.0, %v184
  %186 = vmatmul.f32.gmra.mxu0 %v97
  %v187 = vpop.f32.mrf.mxu0
  %v188 = vadd.f32 0.0, %v187
  %189 = vmatmul.f32.gmra.mxu0 %v99
  %v190 = vpop.f32.mrf.mxu0
  %v191 = vadd.f32 0.0, %v190
  %192 = vmatmul.f32.gmra.mxu0 %v101
  %v193 = vpop.f32.mrf.mxu0
  %v194 = vadd.f32 0.0, %v193
  %195 = vmatmul.f32.gmra.mxu0 %v103
  %v196 = vpop.f32.mrf.mxu0
  %v197 = vadd.f32 0.0, %v196
  %198 = vmatmul.f32.gmra.mxu0 %v105
  %v199 = vpop.f32.mrf.mxu0
  %v200 = vadd.f32 0.0, %v199
  %201 = vmatmul.f32.gmra.mxu0 %v107
  %v202 = vpop.f32.mrf.mxu0
  %v203 = vadd.f32 0.0, %v202
  %204 = vmatmul.f32.gmra.mxu0 %v109
  %v205 = vpop.f32.mrf.mxu0
  %v206 = vadd.f32 0.0, %v205
  %207 = vmatmul.f32.gmra.mxu0 %v111
  %v208 = vpop.f32.mrf.mxu0
  %v209 = vadd.f32 0.0, %v208
  %210 = vmatmul.f32.gmra.mxu0 %v113
  %v211 = vpop.f32.mrf.mxu0
  %v212 = vadd.f32 0.0, %v211
  %213 = vmatmul.f32.gmra.mxu0 %v115
  %v214 = vpop.f32.mrf.mxu0
  %v215 = vadd.f32 0.0, %v214
  %216 = vmatmul.f32.gmra.mxu0 %v117
  %v217 = vpop.f32.mrf.mxu0
  %v218 = vadd.f32 0.0, %v217
  %219 = vdwg.mxu0
  %v220 = vsel %vm94, %v14, 0
  %v222 = vsel %vm94, %v15, 0
  %v224 = vsel %vm94, %v16, 0
  %v226 = vsel %vm94, %v17, 0
  %v228 = vsel %vm94, %v18, 0
  %v230 = vsel %vm94, %v19, 0
  %v232 = vsel %vm94, %v20, 0
  %v234 = vsel %vm94, %v21, 0
  %v236 = vsel %vm94, %v22, 0
  %v238 = vsel %vm94, %v23, 0
  %v240 = vsel %vm94, %v24, 0
  %v242 = vsel %vm94, %v25, 0
  %v245 = vsel %vm94, %v26, 0
  %v248 = vsel %vm94, %v27, 0
  %v251 = vsel %vm94, %v28, 0
  %v254 = vsel %vm94, %v29, 0
  %v257 = vsel %vm94, %v30, 0
  %v260 = vsel %vm94, %v31, 0
  %v263 = vsel %vm94, %v32, 0
  %v266 = vsel %vm94, %v33, 0
  %v269 = vsel %vm94, %v34, 0
  %v272 = vsel %vm94, %v35, 0
  %v275 = vsel %vm94, %v36, 0
  %v278 = vsel %vm94, %v37, 0
  %v281 = vsel %vm94, %v38, 0
  %v284 = vsel %vm94, %v39, 0
  %v287 = vsel %vm94, %v40, 0
  %v290 = vsel %vm94, %v41, 0
  %292 = vmatpush.xpose.msra.mxu0 %v290
  %293 = vmatpush.xpose.msra.mxu0 %v287
  %294 = vmatpush.xpose.msra.mxu0 %v284
  %295 = vmatpush.xpose.msra.mxu0 %v281
  %296 = vmatpush.xpose.msra.mxu0 %v278
  %297 = vmatpush.xpose.msra.mxu0 %v275
  %298 = vmatpush.xpose.msra.mxu0 %v272
  %299 = vmatpush.xpose.msra.mxu0 %v269
  %300 = vmatpush.xpose.msra.mxu0 %v266
  %301 = vmatpush.xpose.msra.mxu0 %v263
  %302 = vmatpush.xpose.msra.mxu0 %v260
  %303 = vmatpush.xpose.msra.mxu0 %v257
  %304 = vmatpush.xpose.msra.mxu0 %v254
  %305 = vmatpush.xpose.msra.mxu0 %v251
  %306 = vmatpush.xpose.msra.mxu0 %v248
  %307 = vmatpush.xpose.msra.mxu0 %v245
  %308 = vmatmul.f32.gmra.mxu0 %v220
  %v309 = vpop.f32.mrf.mxu0
  %v310 = vadd.f32 %v185, %v309
  %311 = vmatmul.f32.gmra.mxu0 %v222
  %v312 = vpop.f32.mrf.mxu0
  %v313 = vadd.f32 %v188, %v312
  %314 = vmatmul.f32.gmra.mxu0 %v224
  %v315 = vpop.f32.mrf.mxu0
  %v316 = vadd.f32 %v191, %v315
  %317 = vmatmul.f32.gmra.mxu0 %v226
  %v318 = vpop.f32.mrf.mxu0
  %v319 = vadd.f32 %v194, %v318
  %320 = vmatmul.f32.gmra.mxu0 %v228
  %v321 = vpop.f32.mrf.mxu0
  %v322 = vadd.f32 %v197, %v321
  %323 = vmatmul.f32.gmra.mxu0 %v230
  %v324 = vpop.f32.mrf.mxu0
  %v325 = vadd.f32 %v200, %v324
  %326 = vmatmul.f32.gmra.mxu0 %v232
  %v327 = vpop.f32.mrf.mxu0
  %v328 = vadd.f32 %v203, %v327
  %329 = vmatmul.f32.gmra.mxu0 %v234
  %v330 = vpop.f32.mrf.mxu0
  %v331 = vadd.f32 %v206, %v330
  %332 = vmatmul.f32.gmra.mxu0 %v236
  %v333 = vpop.f32.mrf.mxu0
  %v334 = vadd.f32 %v209, %v333
  %335 = vmatmul.f32.gmra.mxu0 %v238
  %v336 = vpop.f32.mrf.mxu0
  %v337 = vadd.f32 %v212, %v336
  %338 = vmatmul.f32.gmra.mxu0 %v240
  %v339 = vpop.f32.mrf.mxu0
  %v340 = vadd.f32 %v215, %v339
  %341 = vmatmul.f32.gmra.mxu0 %v242
  %v342 = vpop.f32.mrf.mxu0
  %v343 = vadd.f32 %v218, %v342
  %344 = vdwg.mxu0
  %345 = vset.pattern.permute.xlu0 40
  %346 = vperm.xlu0 %345, %v14
  %v347 = vpop.permute.xlu0 %346
  %349 = vset.pattern.permute.xlu0 40
  %350 = vperm.xlu0 %349, %v15
  %v351 = vpop.permute.xlu0 %350
  %353 = vset.pattern.permute.xlu0 40
  %354 = vperm.xlu0 %353, %v16
  %v355 = vpop.permute.xlu0 %354
  %357 = vset.pattern.permute.xlu0 40
  %358 = vperm.xlu0 %357, %v17
  %v359 = vpop.permute.xlu0 %358
  %361 = vset.pattern.permute.xlu0 40
  %362 = vperm.xlu0 %361, %v18
  %v363 = vpop.permute.xlu0 %362
  %365 = vset.pattern.permute.xlu0 40
  %366 = vperm.xlu0 %365, %v19
  %v367 = vpop.permute.xlu0 %366
  %369 = vset.pattern.permute.xlu0 40
  %370 = vperm.xlu0 %369, %v20
  %v371 = vpop.permute.xlu0 %370
  %373 = vset.pattern.permute.xlu0 40
  %374 = vperm.xlu0 %373, %v21
  %v375 = vpop.permute.xlu0 %374
  %377 = vset.pattern.permute.xlu0 40
  %378 = vperm.xlu0 %377, %v22
  %v379 = vpop.permute.xlu0 %378
  %381 = vset.pattern.permute.xlu0 40
  %382 = vperm.xlu0 %381, %v23
  %v383 = vpop.permute.xlu0 %382
  %385 = vset.pattern.permute.xlu0 40
  %386 = vperm.xlu0 %385, %v24
  %v387 = vpop.permute.xlu0 %386
  %389 = vset.pattern.permute.xlu0 40
  %390 = vperm.xlu0 %389, %v25
  %v391 = vpop.permute.xlu0 %390
  %v393 = vadd.f32 %v310, %v347
  %v394 = vadd.f32 %v313, %v351
  %v395 = vadd.f32 %v316, %v355
  %v396 = vadd.f32 %v319, %v359
  %v397 = vadd.f32 %v322, %v363
  %v398 = vadd.f32 %v325, %v367
  %v399 = vadd.f32 %v328, %v371
  %v400 = vadd.f32 %v331, %v375
  %v401 = vadd.f32 %v334, %v379
  %v402 = vadd.f32 %v337, %v383
  %v403 = vadd.f32 %v340, %v387
  %v404 = vadd.f32 %v343, %v391
  %v405 = vtanh.pop %v393
  %v406 = vtanh.pop %v394
  %v407 = vtanh.pop %v395
  %v408 = vtanh.pop %v396
  %v409 = vtanh.pop %v397
  %v410 = vtanh.pop %v398
  %v411 = vtanh.pop %v399
  %v412 = vtanh.pop %v400
  %v413 = vxor.u32 %v401, 2147483648
  %v414 = vxor.u32 %v402, 2147483648
  %v415 = vxor.u32 %v403, 2147483648
  %v416 = vxor.u32 %v404, 2147483648
  %v417 = vmul.f32 %v413, 1.442695
  %v418 = vpow.pop %v417
  %v419 = vmul.f32 %v414, 1.442695
  %v420 = vpow.pop %v419
  %v421 = vmul.f32 %v415, 1.442695
  %v422 = vpow.pop %v421
  %v423 = vmul.f32 %v416, 1.442695
  %v424 = vpow.pop %v423
  %v425 = vadd.f32 %v418, 1.0
  %v426 = vadd.f32 %v420, 1.0
  %v427 = vadd.f32 %v422, 1.0
  %v428 = vadd.f32 %v424, 1.0
  %v429 = vrcp.pop %v425
  %v430 = vmul.f32 %v425, %v429
  %v431 = vsub.f32 1.0, %v430
  %v432 = vmul.f32 %v429, %v431
  %v433 = vadd.f32 %v429, %v432
  %vm434 = vweird.f32 %v425
  %vm435 = vweird.f32 %v429
  %vm436 = vmor %vm434, %vm435
  %v437 = vsel %vm436, %v429, %v433
  %v438 = vand.u32 2147483647, %v425
  %vm439 = vcmp.eq.f32.partialorder %v438, 8.507059e+37
  %v440 = vand.u32 %v425, 2147483648
  %v441 = vor.u32 1.1754944e-38, %v440
  %v442 = vsel %vm439, %v441, %v437
  %v443 = vmul.f32 1.0, %v442
  %v444 = vrcp.pop %v426
  %v445 = vmul.f32 %v426, %v444
  %v446 = vsub.f32 1.0, %v445
  %v447 = vmul.f32 %v444, %v446
  %v448 = vadd.f32 %v444, %v447
  %vm449 = vweird.f32 %v426
  %vm450 = vweird.f32 %v444
  %vm451 = vmor %vm449, %vm450
  %v452 = vsel %vm451, %v444, %v448
  %v453 = vand.u32 2147483647, %v426
  %vm454 = vcmp.eq.f32.partialorder %v453, 8.507059e+37
  %v455 = vand.u32 %v426, 2147483648
  %v456 = vor.u32 1.1754944e-38, %v455
  %v457 = vsel %vm454, %v456, %v452
  %v458 = vmul.f32 1.0, %v457
  %v459 = vrcp.pop %v427
  %v460 = vmul.f32 %v427, %v459
  %v461 = vsub.f32 1.0, %v460
  %v462 = vmul.f32 %v459, %v461
  %v463 = vadd.f32 %v459, %v462
  %vm464 = vweird.f32 %v427
  %vm465 = vweird.f32 %v459
  %vm466 = vmor %vm464, %vm465
  %v467 = vsel %vm466, %v459, %v463
  %v468 = vand.u32 2147483647, %v427
  %vm469 = vcmp.eq.f32.partialorder %v468, 8.507059e+37
  %v470 = vand.u32 %v427, 2147483648
  %v471 = vor.u32 1.1754944e-38, %v470
  %v472 = vsel %vm469, %v471, %v467
  %v473 = vmul.f32 1.0, %v472
  %v474 = vrcp.pop %v428
  %v475 = vmul.f32 %v428, %v474
  %v476 = vsub.f32 1.0, %v475
  %v477 = vmul.f32 %v474, %v476
  %v478 = vadd.f32 %v474, %v477
  %vm479 = vweird.f32 %v428
  %vm480 = vweird.f32 %v474
  %vm481 = vmor %vm479, %vm480
  %v482 = vsel %vm481, %v474, %v478
  %v483 = vand.u32 2147483647, %v428
  %vm484 = vcmp.eq.f32.partialorder %v483, 8.507059e+37
  %v485 = vand.u32 %v428, 2147483648
  %v486 = vor.u32 1.1754944e-38, %v485
  %v487 = vsel %vm484, %v486, %v482
  %v488 = vmul.f32 1.0, %v487
  %v489 = vsub.f32 %v405, %v409
  %v490 = vsub.f32 %v406, %v410
  %v491 = vsub.f32 %v407, %v411
  %v492 = vsub.f32 %v408, %v412
  %v493 = vmul.f32 %v443, %v489
  %v494 = vmul.f32 %v458, %v490
  %v495 = vmul.f32 %v473, %v491
  %v496 = vmul.f32 %v488, %v492
  %v497 = vadd.f32 %v409, %v493
  %v498 = vadd.f32 %v410, %v494
  %v499 = vadd.f32 %v411, %v495
  %v500 = vadd.f32 %v412, %v496
  %v501 = vld [vmem:[%s0] sm:$0x1]
  %503 = vset.pattern.permute.xlu0 96
  %504 = vperm.xlu0 %503, %v501
  %v505 = vpop.permute.xlu0 %504
  %507 = vrot.lane.b32.xlu0 %v501, 64
  %v508 = vpop.permute.xlu0 %507
  %vm509 = vcmask 261120
  %v510 = vsel %vm509, %v508, 0
  %512 = vmatpush.msra.mxu0 0.0
  %513 = vmatpush.msra.mxu0 0.0
  %514 = vmatpush.msra.mxu0 0.0
  %515 = vmatpush.msra.mxu0 0.0
  %516 = vmatpush.msra.mxu0 0.0
  %517 = vmatpush.msra.mxu0 0.0
  %518 = vmatpush.msra.mxu0 0.0
  %519 = vmatpush.msra.mxu0 0.0
  %520 = vmatpush.msra.mxu0 0.0
  %521 = vmatpush.msra.mxu0 0.0
  %522 = vmatpush.msra.mxu0 0.0
  %523 = vmatpush.msra.mxu0 0.0
  %524 = vmatpush.msra.mxu0 %v500
  %525 = vmatpush.msra.mxu0 %v499
  %526 = vmatpush.msra.mxu0 %v498
  %527 = vmatpush.msra.mxu0 %v497
  %528 = vmatmul.f32.gmra.mxu0 %v510
  %v529 = vpop.f32.mrf.mxu0
  %v530 = vadd.f32 %v505, %v529
  %531 = vdwg.mxu0
  %v532 = vxor.u32 %v530, 2147483648
  %v533 = vmul.f32 %v532, 1.442695
  %v534 = vpow.pop %v533
  %v535 = vadd.f32 %v534, 1.0
  %v536 = vrcp.pop %v535
  %v537 = vmul.f32 %v535, %v536
  %v538 = vsub.f32 1.0, %v537
  %v539 = vmul.f32 %v536, %v538
  %v540 = vadd.f32 %v536, %v539
  %vm541 = vweird.f32 %v535
  %vm542 = vweird.f32 %v536
  %vm543 = vmor %vm541, %vm542
  %v544 = vsel %vm543, %v536, %v540
  %v545 = vand.u32 2147483647, %v535
  %vm546 = vcmp.eq.f32.partialorder %v545, 8.507059e+37
  %v547 = vand.u32 %v535, 2147483648
  %v548 = vor.u32 1.1754944e-38, %v547
  %v549 = vsel %vm546, %v548, %v544
  %v550 = vmul.f32 1.0, %v549
  %551 = vst [vmem:[%s3] sm:$0x1] %v550
  // Predicated region
  $region14: #{classifier_forward.1} parent=0 // pred_check
    _
  $region15: #{classifier_forward.1} parent=0 // pred_check_branch
    %553 = sbr.rel (0) target = $region17
  $region16: #{classifier_forward.1} parent=0 // pred_region
    _
  $region17: #{classifier_forward.1} parent=0 // pred_fallthru
    _
  // Predicated region
  $region18: #{classifier_forward.1} parent=0 // pred_check
    _
  $region19: #{classifier_forward.1} parent=0 // pred_check_branch
    %555 = sbr.rel (0) target = $region21
  $region20: #{classifier_forward.1} parent=0 // pred_region
    _
  $region21: #{classifier_forward.1} parent=0 // pred_fallthru
    _

</llo_original>
